<compile_context>
chip_gen: v7x
topology: tpu7x:2x2x1
jax: 0.10.0
libtpu: 0.0.40
codegen_flags: <defaults>
</compile_context>

<pallas_src>
import jax
import jax.numpy as jnp
from jax.experimental import pallas as pl
from jax.experimental.pallas import tpu as pltpu

_SUBLANE = 8
_LANE = 128
_STREAM_BUDGET_BYTES = 32 * 1024 * 1024  # budget for the double-buffered streamed tiles


def rope_kernel(x_ref, rot_ref, pos_rot_ref, o_ref):
    # x_ref:       (TS, D)  compute-dtype (bf16 by default) rows of this (seq-tile, batch)
    # rot_ref:     (D, D)   compute-dtype rotation matrix (constant block -> fetched once)
    # pos_rot_ref: (TS, D)  f32 precomputed pos_emb @ R for this seq tile
    # o_ref:       (TS, D)  output rows in x.dtype
    acc = jnp.dot(x_ref[...], rot_ref[...], preferred_element_type=jnp.float32)
    o_ref[...] = (acc + pos_rot_ref[...]).astype(o_ref.dtype)


def _round_up(n, m):
    return ((n + m - 1) // m) * m


def _pick_seq_tile(S, stream_bytes_per_row):
    """Pick a seq-row tile (multiple of 8, <=1024) and the padded sequence length."""
    rows_fit = max(_SUBLANE, _STREAM_BUDGET_BYTES // max(stream_bytes_per_row, 1))
    max_rows = max(_SUBLANE, min(1024, (rows_fit // _SUBLANE) * _SUBLANE))
    if S <= max_rows:
        ts = _round_up(S, _SUBLANE)
        return ts, ts
    for ts in (1024, 512, 256, 128, 64, 32, 16, 8):
        if ts <= max_rows and S % ts == 0:
            return ts, S
    ts = min(512, max_rows)
    return ts, _round_up(S, ts)  # ragged S: pad instead of a whole-sequence slab


def _vmem_limit_bytes(TS, D, x_bytes, pos_bytes, out_bytes, rot_bytes):
    need = (
        2 * TS * D * (x_bytes + pos_bytes + out_bytes)  # double-buffered streamed tiles
        + 2 * D * D * rot_bytes                         # rotation matrix buffers
    )
    return int(min(max(need + (8 << 20), 32 << 20), 64 << 20))


def rotary_positional_embedding(x, pos_emb, rot_mat, *, compute_dtype=jnp.bfloat16):
    B, S, D = x.shape
    max_seq_len, d_model = pos_emb.shape
    assert d_model == D and rot_mat.shape == (D, D)
    assert S <= max_seq_len
    pos_emb = pos_emb[:S]
    # Note: MXU efficiency is set by D (contraction dim); real model dims (multiples
    # of 128/256) are ideal. Tiny D (like the demo's 32) is per-step-overhead bound.

    # (x + p) @ R == x @ R + p @ R  -> precompute p @ R once, kept in f32 so the
    # post-matmul add preserves accuracy even when x / R are bf16.
    pos_rot = jnp.dot(
        pos_emb.astype(jnp.float32),
        rot_mat.astype(jnp.float32),
        preferred_element_type=jnp.float32,
    )

    xc = x.astype(compute_dtype)
    rc = rot_mat.astype(compute_dtype)

    x_bytes = jnp.dtype(compute_dtype).itemsize
    rot_bytes = x_bytes
    pos_bytes = 4
    out_bytes = jnp.dtype(x.dtype).itemsize

    stream_per_row = 2 * D * (x_bytes + pos_bytes + out_bytes)
    TS, S_pad = _pick_seq_tile(S, stream_per_row)
    if S_pad != S:
        # TODO(synk): the zero tail is computed and sliced off; a masked tail tile
        # would avoid the extra output pass for very ragged S.
        xc = jnp.pad(xc, ((0, 0), (0, S_pad - S), (0, 0)))
        pos_rot = jnp.pad(pos_rot, ((0, S_pad - S), (0, 0)))

    # seq tiles outer, batch inner: pos_rot tile fetched once per seq tile, R once total.
    grid = (S_pad // TS, B)

    cost = pl.CostEstimate(
        flops=2 * B * S_pad * D * D,
        transcendentals=0,
        bytes_accessed=(
            B * S_pad * D * x_bytes      # x read
            + D * D * rot_bytes          # rotation matrix read once
            + S_pad * D * pos_bytes      # pos_rot read once
            + B * S_pad * D * out_bytes  # output written
        ),
    )

    out = pl.pallas_call(
        rope_kernel,
        out_shape=jax.ShapeDtypeStruct((B, S_pad, D), x.dtype),
        grid_spec=pltpu.PrefetchScalarGridSpec(
            num_scalar_prefetch=0,
            grid=grid,
            in_specs=[
                # x rows for this (seq-tile, batch)
                pl.BlockSpec((pl.Squeezed(), TS, D), lambda s, b: (b, s, 0)),
                # constant rotation matrix: block index never changes -> one HBM fetch
                pl.BlockSpec((D, D), lambda s, b: (0, 0)),
                # positional term: constant across inner batch axis -> one fetch per tile
                pl.BlockSpec((TS, D), lambda s, b: (s, 0)),
            ],
            out_specs=pl.BlockSpec((pl.Squeezed(), TS, D), lambda s, b: (b, s, 0)),
        ),
        compiler_params=pltpu.CompilerParams(
            dimension_semantics=("parallel", "parallel"),
            vmem_limit_bytes=_vmem_limit_bytes(
                TS, D, x_bytes, pos_bytes, out_bytes, rot_bytes
            ),
        ),
        cost_estimate=cost,
    )(xc, rc, pos_rot)

    return out[:, :S, :] if S_pad != S else out


def make_params(d_model, max_seq_len):
    # rotation_matrix[i, j] = cos(i * j * 0.01)
    i = jnp.arange(d_model, dtype=jnp.float32)[:, None]
    j = jnp.arange(d_model, dtype=jnp.float32)[None, :]
    rotation_matrix = jnp.cos(i * j * 0.01)
    # positional_embedding[p, j] = cos(p * j * 0.01)
    p = jnp.arange(max_seq_len, dtype=jnp.float32)[:, None]
    positional_embedding = jnp.cos(p * j * 0.01)
    return positional_embedding, rotation_matrix


if __name__ == "__main__":
    batch = 2
    seq_len = 8      # forward adds pos_emb directly => seq_len == max_seq_len here
    d_model = 32

    pos_emb, rot_mat = make_params(d_model, seq_len)

    key = jax.random.PRNGKey(0)
    x = jax.random.normal(key, (batch, seq_len, d_model), dtype=jnp.float32)

    out = rotary_positional_embedding(x, pos_emb, rot_mat)  # default: bf16 compute
    out = jax.block_until_ready(out)
    assert out.shape == (batch, seq_len, d_model)
    assert out.dtype == x.dtype

    # Strict check: plain-JAX reference using the SAME compute recipe as the kernel
    # (bf16 x/R on the MXU, f32 accumulate, f32 positional add).
    pos_rot_ref = jnp.dot(pos_emb, rot_mat, preferred_element_type=jnp.float32)
    ref_same = (
        jnp.dot(
            x.astype(jnp.bfloat16),
            rot_mat.astype(jnp.bfloat16),
            preferred_element_type=jnp.float32,
        )
        + pos_rot_ref[None]
    ).astype(x.dtype)
    assert jnp.allclose(out, ref_same, atol=1e-4, rtol=1e-4)

    # Semantic check against the exact f32 module math; tolerance accounts only for
    # the bf16 rounding of x and R at the wrapper boundary.
    ref_f32 = jnp.matmul(x + pos_emb[None], rot_mat)
    assert jnp.allclose(out, ref_f32, atol=2e-1, rtol=5e-2)

    print("KERNEL_OK")
</pallas_src>

<mosaic_0001>
module attributes {stable_mosaic.version = 11 : i64} {
  func.func @rope_kernel(%arg0: i32, %arg1: i32, %arg2: memref<1x8x32xbf16, #tpu.memory_space<vmem>>, %arg3: memref<32x32xbf16, #tpu.memory_space<vmem>>, %arg4: memref<8x32xf32, #tpu.memory_space<vmem>>, %arg5: memref<1x8x32xf32, #tpu.memory_space<vmem>>) attributes {dimension_semantics = [#tpu.dimension_semantics<parallel>, #tpu.dimension_semantics<parallel>], iteration_bounds = array<i64: 1, 2>, scalar_prefetch = 0 : i64, scratch_operands = 0 : i64, tpu.core_type = #tpu.core_type<tc>, window_params = [{transform_indices = @transform_0, window_bounds = array<i64: 1, 8, 32>}, {pipeline_mode = #tpu.pipeline_mode<synchronous>, transform_indices = @transform_1, window_bounds = array<i64: 32, 32>}, {transform_indices = @transform_2, window_bounds = array<i64: 8, 32>}, {transform_indices = @transform_3, window_bounds = array<i64: 1, 8, 32>}]} {
    %c0 = arith.constant 0 : index
    %c0_0 = arith.constant 0 : index
    %c0_1 = arith.constant 0 : index
    %0 = vector.load %arg2[%c0, %c0_0, %c0_1] : memref<1x8x32xbf16, #tpu.memory_space<vmem>>, vector<1x8x32xbf16>
    %1 = vector.shape_cast %0 : vector<1x8x32xbf16> to vector<8x32xbf16>
    %c0_2 = arith.constant 0 : index
    %c0_3 = arith.constant 0 : index
    %2 = vector.load %arg3[%c0_2, %c0_3] : memref<32x32xbf16, #tpu.memory_space<vmem>>, vector<32x32xbf16>
    %cst = arith.constant dense<0.000000e+00> : vector<8x32xf32>
    %3 = tpu.matmul %1, %2, %cst {dimension_numbers = #tpu.dot_dimension_numbers<[1], [0], [0], [1], [0, 0, 1, 1], [], []>} : vector<8x32xbf16>, vector<32x32xbf16>, vector<8x32xf32> -> vector<8x32xf32>
    %c0_4 = arith.constant 0 : index
    %c0_5 = arith.constant 0 : index
    %4 = vector.load %arg4[%c0_4, %c0_5] : memref<8x32xf32, #tpu.memory_space<vmem>>, vector<8x32xf32>
    %5 = arith.addf %3, %4 : vector<8x32xf32>
    %c0_6 = arith.constant 0 : index
    %c0_7 = arith.constant 0 : index
    %c0_8 = arith.constant 0 : index
    %6 = vector.load %arg5[%c0_6, %c0_7, %c0_8] : memref<1x8x32xf32, #tpu.memory_space<vmem>>, vector<1x8x32xf32>
    %7 = vector.shape_cast %6 : vector<1x8x32xf32> to vector<8x32xf32>
    %8 = vector.shape_cast %5 : vector<8x32xf32> to vector<1x8x32xf32>
    tpu.vector_store %arg5[%c0_6, %c0_7, %c0_8], %8 {strides = array<i32>} : memref<1x8x32xf32, #tpu.memory_space<vmem>>, vector<1x8x32xf32>,
    return
  }
  func.func @transform_0(%arg0: i32, %arg1: i32) -> (i32, i32, i32) {
    %c0_i32 = arith.constant 0 : i32
    %c0_i32_0 = arith.constant 0 : i32
    return %arg1, %arg0, %c0_i32 : i32, i32, i32
  }
  func.func @transform_1(%arg0: i32, %arg1: i32) -> (i32, i32) {
    %c0_i32 = arith.constant 0 : i32
    %c0_i32_0 = arith.constant 0 : i32
    %c0_i32_1 = arith.constant 0 : i32
    return %c0_i32, %c0_i32_0 : i32, i32
  }
  func.func @transform_2(%arg0: i32, %arg1: i32) -> (i32, i32) {
    %c0_i32 = arith.constant 0 : i32
    %c0_i32_0 = arith.constant 0 : i32
    return %arg0, %c0_i32 : i32, i32
  }
  func.func @transform_3(%arg0: i32, %arg1: i32) -> (i32, i32, i32) {
    %c0_i32 = arith.constant 0 : i32
    %c0_i32_0 = arith.constant 0 : i32
    return %arg1, %arg0, %c0_i32 : i32, i32, i32
  }
}

</mosaic_0001>

<llo_original>
// kernel: tpu_custom_call.1
$region0: #{tpu_custom_call.1}
  #allocation0 [shape = 'u32[]', space=smem, size = 0x4, offset = 0x4, fixed_abs, tag = 'smem constant byte address 0x4 - core index']
  #allocation1 [shape = 'u32[144,128]{1,0:T(1,128)}', space=vmem, size = 0x12000, scoped, tag = 'internal scratch']
  %s0 = inlined_call_operand.hbm [shape: bf16[2,8,32], index: 0, kind: input, shape index: {}]
  %s1 = inlined_call_operand.hbm [shape: bf16[32,32], index: 1, kind: input, shape index: {}]
  %s2 = inlined_call_operand.hbm [shape: f32[8,32], index: 2, kind: input, shape index: {}]
  %s3 = inlined_call_operand.hbm [shape: f32[2,8,32], index: 3, kind: output, shape index: {}]
  %s4 = sld [smem:[#allocation0]]
  $region57: #{tpu_custom_call.1} parent=0
    _
  %s6 = ssub.s32 1, %s4
  %s7 = scalar_select 0, %s6, %s4
  $region1: #{tpu_custom_call.1} parent=0
    #allocation2 [shape = 'u8[4096]{0}', space=vmem, size = 0x1000, scoped, tag = 'input window, operand 0']
    #allocation3 [shape = 's32[2]{0}', space=sflag, size = 0x8, scoped, tag = 'scoped memory for tpu_custom_call.1']
    #allocation4 [shape = 's32[2]{0}', space=sflag, size = 0x8, scoped, tag = 'scoped memory for tpu_custom_call.1']
    #allocation5 [shape = 'u8[8192]{0}', space=vmem, size = 0x2000, scoped, tag = 'input window, operand 1, single buffered']
    #allocation6 [shape = 's32[1]{0}', space=sflag, size = 0x4, scoped, tag = 'scoped memory for tpu_custom_call.1']
    #allocation7 [shape = 'u8[4096]{0}', space=vmem, size = 0x1000, scoped, tag = 'input window, operand 2, single buffered']
    #allocation8 [shape = 'u8[8192]{0}', space=vmem, size = 0x2000, scoped, tag = 'output window, operand 0']
    %8 = vsyncpa [#allocation3], 0
    %s9 = scalar_lea.sflag [#allocation3], 1
    %10 = vsyncpa %s9, 0
    %11 = vsyncpa [#allocation6], 0
    %12 = vsyncpa [#allocation4], 0
    %s13 = scalar_lea.sflag [#allocation4], 1
    %14 = vsyncpa %s13, 0
    loop: start=0, step=1, limit=4
    $region2: #{tpu_custom_call.1} parent=1 // loop_pre_header
      _
    $region3: #{tpu_custom_call.1} parent=1 // loop_header
      %s16 = sphi 0, %s20
      %p17 = scmp.ge.s32.totalorder %s16, 4
      %s23 = sphi 0, %s35
      %s24 = sphi 0, %s31
      %s25 = sphi 0, %s23
      %s26 = sphi 0, %s24
      %s27 = sphi 0, %s25
      %s28 = sphi 0, %s26
      %s40 = sphi 0, %s42
      %s43 = sphi 0, %s40
      %s44 = sphi 0, %s43
      %s60 = sphi 0, %s44
      %s64 = sphi 0, %s64
      %s66 = sphi 0, %s64
      %s67 = sphi 0, %s66
      %s81 = sphi 0, %s67
      %s87 = sphi 0, %s89
      %s90 = sphi 0, %s87
      %s91 = sphi 0, %s90
      %s107 = sphi 0, %s91
      %s115 = sphi 0, %s117
      %s118 = sphi 0, %s115
      %s119 = sphi 0, %s118
      %s135 = sphi 0, %s119
    $region4: #{tpu_custom_call.1} parent=1 // loop_header_branch
      %19 = sbr.rel (%p17) target = $region8
    $region5: #{tpu_custom_call.1} parent=1 // loop_body
      %s21 = ssub.s32 %s16, 1
      %s22 = ssub.s32 %s16, 2
      %s29 = sadd.s32 1, %s24
      %p30 = scmp.ge.s32.totalorder %s29, 2
      %s31 = scalar_select %p30, 0, %s29
      %s32 = sadd.s32 1, %s23
      %s33 = scalar_select %p30, %s32, %s23
      %p34 = scmp.ge.s32.totalorder %s33, 1
      %s35 = scalar_select %p34, 0, %s33
      %s36 = ssub.s32 %s24, %s31
      %s37 = ssub.s32 %s23, %s35
      %s38 = sor.u32 %s36, %s37
      %p39 = scmp.eq.s32.totalorder %s38, 0
      %s41 = sadd.s32 %s40, 1
      %s42 = scalar_select %p39, %s40, %s41
      %p45 = pneg %p39
      %p46 = scmp.eq.s32.totalorder %s16, 1
      %p47 = por %p45, %p46
      %p48 = scmp.ne.s32.totalorder %s40, %s43
      %p49 = scmp.eq.s32.totalorder %s16, 0
      %p50 = por %p48, %p49
      %p51 = scmp.ne.s32.totalorder %s40, %s43
      %p52 = scmp.eq.s32.totalorder %s21, 1
      %p53 = por %p51, %p52
      %p54 = scmp.ne.s32.totalorder %s43, %s44
      %p55 = scmp.eq.s32.totalorder %s21, 0
      %p56 = por %p54, %p55
      %p57 = scmp.ne.s32.totalorder %s43, %s44
      %p58 = scmp.eq.s32.totalorder %s22, 1
      %p59 = por %p57, %p58
      %p61 = scmp.ne.s32.totalorder %s44, %s60
      %p62 = scmp.eq.s32.totalorder %s22, 0
      %p63 = por %p61, %p62
      %s65 = sadd.s32 %s64, 1
      %p68 = scmp.eq.s32.totalorder %s16, 1
      %p69 = scmp.ne.s32.totalorder %s64, %s66
      %p70 = scmp.eq.s32.totalorder %s16, 0
      %p71 = por %p69, %p70
      %p72 = scmp.ne.s32.totalorder %s64, %s66
      %p73 = scmp.eq.s32.totalorder %s21, 1
      %p74 = por %p72, %p73
      %p75 = scmp.ne.s32.totalorder %s66, %s67
      %p76 = scmp.eq.s32.totalorder %s21, 0
      %p77 = por %p75, %p76
      %p78 = scmp.ne.s32.totalorder %s66, %s67
      %p79 = scmp.eq.s32.totalorder %s22, 1
      %p80 = por %p78, %p79
      %p82 = scmp.ne.s32.totalorder %s67, %s81
      %p83 = scmp.eq.s32.totalorder %s22, 0
      %p84 = por %p82, %p83
      %s85 = ssub.s32 %s23, %s35
      %p86 = scmp.eq.s32.totalorder %s85, 0
      %s88 = sadd.s32 %s87, 1
      %s89 = scalar_select %p86, %s87, %s88
      %p92 = pneg %p86
      %p93 = scmp.eq.s32.totalorder %s16, 1
      %p94 = por %p92, %p93
      %p95 = scmp.ne.s32.totalorder %s87, %s90
      %p96 = scmp.eq.s32.totalorder %s16, 0
      %p97 = por %p95, %p96
      %p98 = scmp.ne.s32.totalorder %s87, %s90
      %p99 = scmp.eq.s32.totalorder %s21, 1
      %p100 = por %p98, %p99
      %p101 = scmp.ne.s32.totalorder %s90, %s91
      %p102 = scmp.eq.s32.totalorder %s21, 0
      %p103 = por %p101, %p102
      %p104 = scmp.ne.s32.totalorder %s90, %s91
      %p105 = scmp.eq.s32.totalorder %s22, 1
      %p106 = por %p104, %p105
      %p108 = scmp.ne.s32.totalorder %s91, %s107
      %p109 = scmp.eq.s32.totalorder %s22, 0
      %p110 = por %p108, %p109
      %s111 = ssub.s32 %s24, %s31
      %s112 = ssub.s32 %s23, %s35
      %s113 = sor.u32 %s111, %s112
      %p114 = scmp.eq.s32.totalorder %s113, 0
      %s116 = sadd.s32 %s115, 1
      %s117 = scalar_select %p114, %s115, %s116
      %p120 = pneg %p114
      %p121 = scmp.eq.s32.totalorder %s16, 1
      %p122 = por %p120, %p121
      %p123 = scmp.ne.s32.totalorder %s115, %s118
      %p124 = scmp.eq.s32.totalorder %s16, 0
      %p125 = por %p123, %p124
      %p126 = scmp.ne.s32.totalorder %s115, %s118
      %p127 = scmp.eq.s32.totalorder %s21, 1
      %p128 = por %p126, %p127
      %p129 = scmp.ne.s32.totalorder %s118, %s119
      %p130 = scmp.eq.s32.totalorder %s21, 0
      %p131 = por %p129, %p130
      %p132 = scmp.ne.s32.totalorder %s118, %s119
      %p133 = scmp.eq.s32.totalorder %s22, 1
      %p134 = por %p132, %p133
      %p136 = scmp.ne.s32.totalorder %s119, %s135
      %p137 = scmp.eq.s32.totalorder %s22, 0
      %p138 = por %p136, %p137
      %p139 = scmp.le.s32.totalorder 1, %s16
      %p140 = scmp.lt.s32.totalorder %s16, 3
      %p141 = pnand %p139, %p140
      %p142 = pneg %p141
      // Predicated region
      $region9: #{tpu_custom_call.1} parent=5 // pred_check
        _
      $region10: #{tpu_custom_call.1} parent=5 // pred_check_branch
        %144 = sbr.rel (%p141) target = $region12
      $region11: #{tpu_custom_call.1} parent=5 // pred_region
        %s145 = ssub.s32 %s16, 1
        // Predicated region
        $region13: #{tpu_custom_call.1} parent=11 // pred_check
          %p146 = pneg %p77
        $region14: #{tpu_custom_call.1} parent=11 // pred_check_branch
          %148 = sbr.rel (%p146) target = $region16
        $region15: #{tpu_custom_call.1} parent=11 // pred_region
          %s150 = ssub.s32 256, 256
          %151 = vsyncadd [#allocation6], %s150
          %s152 = sshll.u32 [#allocation5], 4
          %s153 = int_to_ptr.vmem [resolvable:$true] %s152
          %158 = dma.hbm_to_vmem [thread:$0]  %s1, 256, %s153, [#allocation6], 64, 64, 4
        $region16: #{tpu_custom_call.1} parent=11 // pred_fallthru
          _
        // Predicated region
        $region17: #{tpu_custom_call.1} parent=11 // pred_check
          %p159 = pneg %p103
        $region18: #{tpu_custom_call.1} parent=11 // pred_check_branch
          %161 = sbr.rel (%p159) target = $region20
        $region19: #{tpu_custom_call.1} parent=11 // pred_region
          %s163 = ssub.s32 128, 128
          %164 = vsyncadd [#allocation6], %s163
          %s165 = smul.addr %s25, 128
          %s166 = scalar_lea.hbm %s2, %s165
          %s168 = sshll.u32 [#allocation7], 4
          %s169 = int_to_ptr.vmem [resolvable:$true] %s168
          %171 = dma.hbm_to_vmem [thread:$0]  %s166, 128, %s169, [#allocation6]
        $region20: #{tpu_custom_call.1} parent=11 // pred_fallthru
          _
      $region12: #{tpu_custom_call.1} parent=5 // pred_fallthru
        _
      %p172 = scmp.lt.s32.totalorder %s16, 2
      // Predicated region
      $region21: #{tpu_custom_call.1} parent=5 // pred_check
        %p173 = pneg %p172
      $region22: #{tpu_custom_call.1} parent=5 // pred_check_branch
        %175 = sbr.rel (%p173) target = $region24
      $region23: #{tpu_custom_call.1} parent=5 // pred_region
        // Predicated region
        $region25: #{tpu_custom_call.1} parent=23 // pred_check
          %p176 = pneg %p50
        $region26: #{tpu_custom_call.1} parent=23 // pred_check_branch
          %178 = sbr.rel (%p176) target = $region28
        $region27: #{tpu_custom_call.1} parent=23 // pred_region
          %s179 = sand.u32 %s40, 1
          %s180 = scalar_lea.sflag [#allocation3], %s179
          %s181 = sand.u32 %s40, 1
          %s182 = smul.addr %s181, 4
          %s183 = scalar_lea.vmem [#allocation2], %s182
          %s185 = ssub.s32 64, 64
          %186 = vsyncadd %s180, %s185
          %s187 = sadd.s32 %s23, %s24
          %s188 = smul.addr %s187, 64
          %s189 = scalar_lea.hbm %s0, %s188
          %s191 = sshll.u32 %s183, 4
          %s192 = int_to_ptr.vmem [resolvable:$true] %s191
          %194 = dma.hbm_to_vmem [thread:$0]  %s189, 64, %s192, %s180
        $region28: #{tpu_custom_call.1} parent=23 // pred_fallthru
          _
      $region24: #{tpu_custom_call.1} parent=5 // pred_fallthru
        _
      %p195 = scmp.le.s32.totalorder 1, %s16
      %p196 = scmp.lt.s32.totalorder %s16, 3
      %p197 = pnand %p195, %p196
      %p198 = pneg %p197
      // Predicated region
      $region29: #{tpu_custom_call.1} parent=5 // pred_check
        _
      $region30: #{tpu_custom_call.1} parent=5 // pred_check_branch
        %200 = sbr.rel (%p197) target = $region32
      $region31: #{tpu_custom_call.1} parent=5 // pred_region
        %s201 = ssub.s32 %s16, 1
        %s202 = sand.u32 %s43, 1
        %s203 = scalar_lea.sflag [#allocation3], %s202
        %s204 = sand.u32 %s43, 1
        %s205 = smul.addr %s204, 4
        %s206 = scalar_lea.vmem [#allocation2], %s205
        // Predicated region
        $region33: #{tpu_custom_call.1} parent=31 // pred_check
          %p207 = pneg %p56
        $region34: #{tpu_custom_call.1} parent=31 // pred_check_branch
          %209 = sbr.rel (%p207) target = $region36
        $region35: #{tpu_custom_call.1} parent=31 // pred_region
          %210 = dma.done %s203, 64
        $region36: #{tpu_custom_call.1} parent=31 // pred_fallthru
          _
        // Predicated region
        $region37: #{tpu_custom_call.1} parent=31 // pred_check
          %p211 = pneg %p77
        $region38: #{tpu_custom_call.1} parent=31 // pred_check_branch
          %213 = sbr.rel (%p211) target = $region40
        $region39: #{tpu_custom_call.1} parent=31 // pred_region
          %214 = dma.done [#allocation6], 256
        $region40: #{tpu_custom_call.1} parent=31 // pred_fallthru
          _
        // Predicated region
        $region41: #{tpu_custom_call.1} parent=31 // pred_check
          %p215 = pneg %p103
        $region42: #{tpu_custom_call.1} parent=31 // pred_check_branch
          %217 = sbr.rel (%p215) target = $region44
        $region43: #{tpu_custom_call.1} parent=31 // pred_region
          %218 = dma.done [#allocation6], 128
        $region44: #{tpu_custom_call.1} parent=31 // pred_fallthru
          _
        %s219 = sand.u32 %s43, 1
        %s220 = scalar_lea.sflag [#allocation3], %s219
        %s221 = sand.u32 %s43, 1
        %s222 = smul.addr %s221, 4
        %s223 = scalar_lea.vmem [#allocation2], %s222
        %p224 = pneg %p56
        %p225 = pneg %p53
        %p226 = pneg %p77
        %p227 = pneg %p74
        %p228 = pneg %p103
        %p229 = pneg %p100
        %p230 = pneg %p131
        %p231 = pneg %p128
        %s232 = sand.u32 %s118, 1
        %s233 = scalar_lea.sflag [#allocation4], %s232
        %s234 = sand.u32 %s118, 1
        %s235 = smul.addr %s234, 8
        %s236 = scalar_lea.vmem [#allocation8], %s235
        %v238 = vld [vmem:[%s206] sm:$0xf]
        %v239 = vld [vmem:[#allocation5] sm:$0xf]
        %v240 = vld [vmem:[#allocation5 + $0x4] sm:$0xf]
        %v241 = vld [vmem:[#allocation5 + $0x8] sm:$0xf]
        %v242 = vld [vmem:[#allocation5 + $0xc] sm:$0xf]
        %v243 = vld [vmem:[#allocation7] sm:$0xff]
        %v248 = vunpack.c.l.b16 %v239
        %v249 = vunpack.c.l.b16 %v240
        %v250 = vunpack.c.l.b16 %v241
        %v251 = vunpack.c.l.b16 %v242
        %v252 = vpack.c.b16 %v249, %v248
        %v253 = vpack.c.b16 %v251, %v250
        %vm256 = vcmask 261120
        %v258 = vsel %vm256, %v238, 0
        %260 = vmatprep.subr.bf16.mxu0 0
        %261 = vmatpush1.bf16.msra.mxu0 %v252
        %262 = vmatprep.subr.bf16.mxu0 0
        %263 = vmatpush1.bf16.msra.mxu0 %v253
        %264 = vmatprep.subr.bf16.mxu0 0
        %265 = vmatpush1.bf16.msra.mxu0 0
        %266 = vmatprep.subr.bf16.mxu0 0
        %267 = vmatpush1.bf16.msra.mxu0 0
        %268 = vmatprep.subr.bf16.mxu0 0
        %269 = vmatpush1.bf16.msra.mxu0 0
        %270 = vmatprep.subr.bf16.mxu0 0
        %271 = vmatpush1.bf16.msra.mxu0 0
        %272 = vmatprep.subr.bf16.mxu0 0
        %273 = vmatpush1.bf16.msra.mxu0 0
        %274 = vmatprep.subr.bf16.mxu0 0
        %275 = vmatpush1.bf16.msra.mxu0 0
        %276 = vmatprep.subr.bf16.mxu0 0
        %277 = vmatpush1.bf16.msra.mxu0 0
        %278 = vmatprep.subr.bf16.mxu0 0
        %279 = vmatpush1.bf16.msra.mxu0 0
        %280 = vmatprep.subr.bf16.mxu0 0
        %281 = vmatpush1.bf16.msra.mxu0 0
        %282 = vmatprep.subr.bf16.mxu0 0
        %283 = vmatpush1.bf16.msra.mxu0 0
        %284 = vmatprep.subr.bf16.mxu0 0
        %285 = vmatpush1.bf16.msra.mxu0 0
        %286 = vmatprep.subr.bf16.mxu0 0
        %287 = vmatpush1.bf16.msra.mxu0 0
        %288 = vmatprep.subr.bf16.mxu0 0
        %289 = vmatpush1.bf16.msra.mxu0 0
        %290 = vmatprep.subr.bf16.mxu0 0
        %291 = vmatpush1.bf16.msra.mxu0 0
        %292 = vmatprep.mubr.bf16.mxu0 0
        %293 = vmatmul.mubr.bf16.gmra.mrb[0].mxu0 %v258
        %v294 = vpop.f32.mrb[0].mxu0
        %v295 = vadd.f32 %v243, %v294
        %v296 = vpop.f32.mrb[0].mxu0
        %v297 = vpop.f32.mrb[0].mxu0
        %v298 = vpop.f32.mrb[0].mxu0
        %299 = vdwg.mxu0
        %300 = vst.msk [vmem:[%s236] sm:$0xff] %vm256, %v295
        %s301 = sand.u32 %s118, 1
        %s302 = scalar_lea.sflag [#allocation4], %s301
        %s303 = sand.u32 %s118, 1
        %s304 = smul.addr %s303, 8
        %s305 = scalar_lea.vmem [#allocation8], %s304
        // Predicated region
        $region45: #{tpu_custom_call.1} parent=31 // pred_check
          %p306 = pneg %p128
        $region46: #{tpu_custom_call.1} parent=31 // pred_check_branch
          %308 = sbr.rel (%p306) target = $region48
        $region47: #{tpu_custom_call.1} parent=31 // pred_region
          %s310 = ssub.s32 128, 128
          %311 = vsyncadd %s302, %s310
          %s312 = sadd.s32 %s25, %s26
          %s313 = smul.addr %s312, 128
          %s314 = scalar_lea.hbm %s3, %s313
          %s316 = sshll.u32 %s305, 4
          %s317 = int_to_ptr.vmem [resolvable:$true] %s316
          %319 = dma.vmem_to_hbm [thread:$0]  %s317, 128, %s314, %s302
        $region48: #{tpu_custom_call.1} parent=31 // pred_fallthru
          _
      $region32: #{tpu_custom_call.1} parent=5 // pred_fallthru
        _
      %p320 = scmp.le.s32.totalorder 2, %s16
      // Predicated region
      $region49: #{tpu_custom_call.1} parent=5 // pred_check
        %p321 = pneg %p320
      $region50: #{tpu_custom_call.1} parent=5 // pred_check_branch
        %323 = sbr.rel (%p321) target = $region52
      $region51: #{tpu_custom_call.1} parent=5 // pred_region
        %s324 = ssub.s32 %s16, 2
        // Predicated region
        $region53: #{tpu_custom_call.1} parent=51 // pred_check
          %p325 = pneg %p134
        $region54: #{tpu_custom_call.1} parent=51 // pred_check_branch
          %327 = sbr.rel (%p325) target = $region56
        $region55: #{tpu_custom_call.1} parent=51 // pred_region
          %s328 = sand.u32 %s119, 1
          %s329 = scalar_lea.sflag [#allocation4], %s328
          %s330 = sand.u32 %s119, 1
          %s331 = smul.addr %s330, 8
          %s332 = scalar_lea.vmem [#allocation8], %s331
          %333 = dma.done %s329, 128
        $region56: #{tpu_custom_call.1} parent=51 // pred_fallthru
          _
      $region52: #{tpu_custom_call.1} parent=5 // pred_fallthru
        _
    $region6: #{tpu_custom_call.1} parent=1 // loop_footer
      %s20 = sadd.s32 1, %s16
    $region7: #{tpu_custom_call.1} parent=1 // loop_footer_branch
      %15 = sbr.rel target = $region3
    $region8: #{tpu_custom_call.1} parent=1 // loop_exit
      _
    %334 = vsyncpa [#allocation3], 1
    %s335 = scalar_lea.sflag [#allocation3], 1
    %336 = vsyncpa %s335, 1
    %337 = vsyncpa [#allocation6], 1
    %338 = vsyncpa [#allocation4], 1
    %s339 = scalar_lea.sflag [#allocation4], 1
    %340 = vsyncpa %s339, 1

</llo_original>
